<compile_context>
chip_gen: v7x
topology: tpu7x:2x2x1
jax: 0.10.0
libtpu: 0.0.40
codegen_flags: <defaults>
</compile_context>

<pallas_src>
import numpy as np
import jax
import jax.numpy as jnp
from jax.experimental import pallas as pl
from jax.experimental.pallas import tpu as pltpu


def _decoder_kernel(z_ref, w1_ref, b1_ref, w2_ref, b2_ref, out_ref):
    # Layer 1: MXU matmul (f32 accumulation), bias + ReLU in f32 on the VPU.
    h = jnp.dot(z_ref[...], w1_ref[...], preferred_element_type=jnp.float32)
    h = jnp.maximum(h + b1_ref[...], 0.0)                 # (TM, hidden_p) f32

    # Layer 2: MXU matmul; cast h to the weight dtype (bf16 path by default,
    # no-op for f32 weights).  Accumulate in f32.
    r = jnp.dot(h.astype(w2_ref.dtype), w2_ref[...],
                preferred_element_type=jnp.float32)
    r = r + b2_ref[...]                                    # (TM, out_dim) f32

    # sigmoid(x) = 1 / (1 + exp(-x)): exp and the approx reciprocal both run
    # on the EUP slot, keeping the VALUs free for the bias/ReLU/cast work.
    r = pl.reciprocal(1.0 + jnp.exp(-r), approx=True)

    # bf16 store (when out_dtype=bf16) halves HBM writeback and vst count.
    out_ref[...] = r.astype(out_ref.dtype)


def _choose_batch_tile(B, target_tile):
    """Batch-tile rows: multiple of 8, ~target_tile rows, and (for batches
    big enough to matter) an even number of grid steps >= 2 so the 'parallel'
    grid axis overlaps the DMA pipeline and load-balances v7x's 2 TCs."""
    if B < 16:
        return ((B + 7) // 8) * 8              # tiny batch: one small tile
    tiles = max(2, int(round(B / float(target_tile))))
    tiles += tiles % 2                          # even grid for v7x's 2 TCs
    tm = -(-B // tiles)                         # ceil divide
    tm = ((tm + 7) // 8) * 8                    # sublane-aligned
    return min(tm, 2048)                        # keep VMEM well inside v7x's 64 MiB


def decoder_forward(z, w1, b1, w2, b2, image_shape, *,
                    block_m=1024,
                    weights_dtype=jnp.bfloat16,
                    out_dtype=jnp.float32):
    """z: (B, z_dim) f32.  w1: (z_dim, hidden), w2: (hidden, out_dim) (weights
    stored pre-transposed vs. PyTorch's (out, in)).  Returns (B, *image_shape)
    in `out_dtype`.  weights_dtype=None gives the exact all-f32 matmul path;
    out_dtype=jnp.bfloat16 halves the dominant HBM writeback stream."""
    B, z_dim = z.shape
    hidden = w1.shape[1]
    out_dim = w2.shape[1]
    assert int(np.prod(image_shape)) == out_dim

    # --- Zero-pad hidden to a multiple of 128 (400 -> 512): lane-dense vregs
    #     and full-width contractions.  Exact: padded b1 columns are 0, so the
    #     padded h columns are relu(0)=0 and hit zero-padded w2 rows.
    hidden_p = ((hidden + 127) // 128) * 128
    if hidden_p != hidden:
        w1 = jnp.pad(w1, ((0, 0), (0, hidden_p - hidden)))
        b1 = jnp.pad(b1, (0, hidden_p - hidden))
        w2 = jnp.pad(w2, ((0, hidden_p - hidden), (0, 0)))
    # z_dim (K=32) is intentionally NOT padded to 128 (MXU pads K internally).

    # --- Matmul-input dtype (bf16 by default).  Biases / elementwise stay f32.
    if weights_dtype is not None:
        z = z.astype(weights_dtype)
        w1 = w1.astype(weights_dtype)
        w2 = w2.astype(weights_dtype)

    b1_2d = b1.reshape(1, hidden_p).astype(jnp.float32)
    b2_2d = b2.reshape(1, out_dim).astype(jnp.float32)

    # --- Batch tiling: large tile (~block_m rows), even grid when possible.
    tm = _choose_batch_tile(B, block_m)
    Bp = ((B + tm - 1) // tm) * tm
    if Bp != B:
        z = jnp.pad(z, ((0, Bp - B), (0, 0)))
    num_tiles = Bp // tm

    # --- Explicit VMEM budget (v7x: 64 MiB physical / 32 MiB scoped default).
    wsz = jnp.dtype(w1.dtype).itemsize
    zsz = jnp.dtype(z.dtype).itemsize
    osz = jnp.dtype(out_dtype).itemsize
    need = (2 * tm * z_dim * zsz                              # z tiles (x2 bufs)
            + 2 * tm * out_dim * osz                          # out tiles (x2 bufs)
            + 2 * (z_dim * hidden_p + hidden_p * out_dim) * wsz   # weights
            + 2 * (hidden_p + out_dim) * 4                        # biases
            + 2 * tm * (hidden_p + out_dim) * 4)              # f32 temporaries
    vmem_limit = int(min(64 << 20, max(32 << 20, need + (8 << 20))))

    flat = pl.pallas_call(
        _decoder_kernel,
        out_shape=jax.ShapeDtypeStruct((Bp, out_dim), out_dtype),
        grid_spec=pltpu.PrefetchScalarGridSpec(
            num_scalar_prefetch=0,
            grid=(num_tiles,),
            in_specs=[
                # Batch-tiled activations: double-buffered across grid steps.
                pl.BlockSpec((tm, z_dim), lambda i: (i, 0)),
                # Weights/biases: constant index_map -> DMA'd once, resident
                # in VMEM for all grid steps (no re-DMA).
                pl.BlockSpec((z_dim, hidden_p), lambda i: (0, 0)),
                pl.BlockSpec((1, hidden_p), lambda i: (0, 0)),
                pl.BlockSpec((hidden_p, out_dim), lambda i: (0, 0)),
                pl.BlockSpec((1, out_dim), lambda i: (0, 0)),
            ],
            out_specs=pl.BlockSpec((tm, out_dim), lambda i: (i, 0)),
        ),
        compiler_params=pltpu.CompilerParams(
            dimension_semantics=("parallel",),
            vmem_limit_bytes=vmem_limit),
    )(z, w1, b1_2d, w2, b2_2d)

    flat = flat[:B]
    # NCHW reshape is wrapper glue; the kernel keeps a lane-dense flat layout.
    return flat.reshape((B,) + tuple(image_shape))


def _ref_forward(z, w1, b1, w2, b2, image_shape):
    h = jax.nn.relu(z @ w1 + b1)
    r = jax.nn.sigmoid(h @ w2 + b2)
    return r.reshape((z.shape[0],) + tuple(image_shape))


if __name__ == "__main__":
    # Shapes consistent with the module: latent dim 32, 1x16x16 image (NCHW).
    z_dim = 32
    hidden = 400
    image_shape = (1, 16, 16)
    out_dim = int(np.prod(image_shape))

    key = jax.random.PRNGKey(0)
    k_z, k_w1, k_b1, k_w2, k_b2 = jax.random.split(key, 5)

    # Deterministic, PyTorch-Linear-like uniform init (U[-1/sqrt(fan_in), ...]).
    lim1 = 1.0 / np.sqrt(z_dim)
    w1 = jax.random.uniform(k_w1, (z_dim, hidden), jnp.float32, -lim1, lim1)
    b1 = jax.random.uniform(k_b1, (hidden,), jnp.float32, -lim1, lim1)
    lim2 = 1.0 / np.sqrt(hidden)
    w2 = jax.random.uniform(k_w2, (hidden, out_dim), jnp.float32, -lim2, lim2)
    b2 = jax.random.uniform(k_b2, (out_dim,), jnp.float32, -lim2, lim2)

    # --- Check 1: tiny batch (B=2), all-f32 matmuls, f32 output.  The only
    #     deviation from the reference is the approx EUP reciprocal in the
    #     sigmoid, so the tolerance stays tight on the [0,1] output range. ----
    B = 2
    z = jax.random.normal(k_z, (B, z_dim), dtype=jnp.float32)
    out = decoder_forward(z, w1, b1, w2, b2, image_shape,
                          weights_dtype=None, out_dtype=jnp.float32)
    out = jax.block_until_ready(out)
    ref = _ref_forward(z, w1, b1, w2, b2, image_shape)
    assert out.shape == (B,) + image_shape, out.shape
    np.testing.assert_allclose(np.asarray(out), np.asarray(ref),
                               rtol=5e-3, atol=5e-3)

    # --- Check 2: batched path (B=2048 -> tm=1024, grid=(2,): even for v7x's
    #     two TCs), default bf16 matmul inputs and bf16 output (halves the
    #     dominant HBM writeback stream); looser tolerance for bf16. ----------
    Bb = 2048
    zb = jax.random.normal(k_z, (Bb, z_dim), dtype=jnp.float32)
    out_b = decoder_forward(zb, w1, b1, w2, b2, image_shape,
                            block_m=1024, out_dtype=jnp.bfloat16)
    out_b = jax.block_until_ready(out_b)
    ref_b = _ref_forward(zb, w1, b1, w2, b2, image_shape)
    assert out_b.shape == (Bb,) + image_shape, out_b.shape
    out_b_f32 = np.asarray(jnp.asarray(out_b, dtype=jnp.float32))
    np.testing.assert_allclose(out_b_f32, np.asarray(ref_b),
                               rtol=3e-2, atol=3e-2)

    print("KERNEL_OK")
</pallas_src>

<mosaic_0001>
module attributes {stable_mosaic.version = 11 : i64} {
  func.func @_decoder_kernel(%arg0: i32, %arg1: memref<8x32xf32, #tpu.memory_space<vmem>>, %arg2: memref<32x512xf32, #tpu.memory_space<vmem>>, %arg3: memref<1x512xf32, #tpu.memory_space<vmem>>, %arg4: memref<512x256xf32, #tpu.memory_space<vmem>>, %arg5: memref<1x256xf32, #tpu.memory_space<vmem>>, %arg6: memref<8x256xf32, #tpu.memory_space<vmem>>) attributes {dimension_semantics = [#tpu.dimension_semantics<parallel>], iteration_bounds = array<i64: 1>, scalar_prefetch = 0 : i64, scratch_operands = 0 : i64, tpu.core_type = #tpu.core_type<tc>, window_params = [{transform_indices = @transform_0, window_bounds = array<i64: 8, 32>}, {pipeline_mode = #tpu.pipeline_mode<synchronous>, transform_indices = @transform_1, window_bounds = array<i64: 32, 512>}, {pipeline_mode = #tpu.pipeline_mode<synchronous>, transform_indices = @transform_2, window_bounds = array<i64: 1, 512>}, {pipeline_mode = #tpu.pipeline_mode<synchronous>, transform_indices = @transform_3, window_bounds = array<i64: 512, 256>}, {pipeline_mode = #tpu.pipeline_mode<synchronous>, transform_indices = @transform_4, window_bounds = array<i64: 1, 256>}, {transform_indices = @transform_5, window_bounds = array<i64: 8, 256>}]} {
    %c0 = arith.constant 0 : index
    %c0_0 = arith.constant 0 : index
    %0 = vector.load %arg1[%c0, %c0_0] : memref<8x32xf32, #tpu.memory_space<vmem>>, vector<8x32xf32>
    %c0_1 = arith.constant 0 : index
    %c0_2 = arith.constant 0 : index
    %1 = vector.load %arg2[%c0_1, %c0_2] : memref<32x512xf32, #tpu.memory_space<vmem>>, vector<32x512xf32>
    %cst = arith.constant dense<0.000000e+00> : vector<8x512xf32>
    %2 = tpu.matmul %0, %1, %cst {dimension_numbers = #tpu.dot_dimension_numbers<[1], [0], [0], [1], [0, 0, 1, 1], [], []>} : vector<8x32xf32>, vector<32x512xf32>, vector<8x512xf32> -> vector<8x512xf32>
    %c0_3 = arith.constant 0 : index
    %c0_4 = arith.constant 0 : index
    %3 = vector.load %arg3[%c0_3, %c0_4] : memref<1x512xf32, #tpu.memory_space<vmem>>, vector<1x512xf32>
    %4 = vector.broadcast %3 : vector<1x512xf32> to vector<8x512xf32>
    %5 = arith.addf %2, %4 : vector<8x512xf32>
    %cst_5 = arith.constant 0.000000e+00 : f32
    %6 = vector.broadcast %cst_5 : f32 to vector<8x512xf32>
    %7 = arith.maximumf %5, %6 : vector<8x512xf32>
    %c0_6 = arith.constant 0 : index
    %c0_7 = arith.constant 0 : index
    %8 = vector.load %arg4[%c0_6, %c0_7] : memref<512x256xf32, #tpu.memory_space<vmem>>, vector<512x256xf32>
    %cst_8 = arith.constant dense<0.000000e+00> : vector<8x256xf32>
    %9 = tpu.matmul %7, %8, %cst_8 {dimension_numbers = #tpu.dot_dimension_numbers<[1], [0], [0], [1], [0, 0, 1, 1], [], []>} : vector<8x512xf32>, vector<512x256xf32>, vector<8x256xf32> -> vector<8x256xf32>
    %c0_9 = arith.constant 0 : index
    %c0_10 = arith.constant 0 : index
    %10 = vector.load %arg5[%c0_9, %c0_10] : memref<1x256xf32, #tpu.memory_space<vmem>>, vector<1x256xf32>
    %11 = vector.broadcast %10 : vector<1x256xf32> to vector<8x256xf32>
    %12 = arith.addf %9, %11 : vector<8x256xf32>
    %cst_11 = arith.constant 0.000000e+00 : f32
    %13 = vector.broadcast %cst_11 : f32 to vector<8x256xf32>
    %14 = arith.subf %13, %12 : vector<8x256xf32>
    %15 = math.exp %14 : vector<8x256xf32>
    %cst_12 = arith.constant 1.000000e+00 : f32
    %16 = vector.broadcast %cst_12 : f32 to vector<8x256xf32>
    %17 = arith.addf %16, %15 : vector<8x256xf32>
    %18 = tpu.reciprocal %17 {approx = true} : vector<8x256xf32> -> vector<8x256xf32>
    %c0_13 = arith.constant 0 : index
    %c0_14 = arith.constant 0 : index
    %19 = vector.load %arg6[%c0_13, %c0_14] : memref<8x256xf32, #tpu.memory_space<vmem>>, vector<8x256xf32>
    tpu.vector_store %arg6[%c0_13, %c0_14], %18 {strides = array<i32>} : memref<8x256xf32, #tpu.memory_space<vmem>>, vector<8x256xf32>,
    return
  }
  func.func @transform_0(%arg0: i32) -> (i32, i32) {
    %c0_i32 = arith.constant 0 : i32
    %c0_i32_0 = arith.constant 0 : i32
    return %arg0, %c0_i32 : i32, i32
  }
  func.func @transform_1(%arg0: i32) -> (i32, i32) {
    %c0_i32 = arith.constant 0 : i32
    %c0_i32_0 = arith.constant 0 : i32
    %c0_i32_1 = arith.constant 0 : i32
    return %c0_i32, %c0_i32_0 : i32, i32
  }
  func.func @transform_2(%arg0: i32) -> (i32, i32) {
    %c0_i32 = arith.constant 0 : i32
    %c0_i32_0 = arith.constant 0 : i32
    %c0_i32_1 = arith.constant 0 : i32
    return %c0_i32, %c0_i32_0 : i32, i32
  }
  func.func @transform_3(%arg0: i32) -> (i32, i32) {
    %c0_i32 = arith.constant 0 : i32
    %c0_i32_0 = arith.constant 0 : i32
    %c0_i32_1 = arith.constant 0 : i32
    return %c0_i32, %c0_i32_0 : i32, i32
  }
  func.func @transform_4(%arg0: i32) -> (i32, i32) {
    %c0_i32 = arith.constant 0 : i32
    %c0_i32_0 = arith.constant 0 : i32
    %c0_i32_1 = arith.constant 0 : i32
    return %c0_i32, %c0_i32_0 : i32, i32
  }
  func.func @transform_5(%arg0: i32) -> (i32, i32) {
    %c0_i32 = arith.constant 0 : i32
    %c0_i32_0 = arith.constant 0 : i32
    return %arg0, %c0_i32 : i32, i32
  }
}

</mosaic_0001>

<llo_original>
// kernel: tpu_custom_call.1
$region0: #{tpu_custom_call.1}
  #allocation0 [shape = 'u32[]', space=smem, size = 0x4, offset = 0x4, fixed_abs, tag = 'smem constant byte address 0x4 - core index']
  #allocation1 [shape = 'u32[144,128]{1,0:T(1,128)}', space=vmem, size = 0x12000, scoped, tag = 'internal scratch']
  %s0 = inlined_call_operand.hbm [shape: f32[8,32], index: 0, kind: input, shape index: {}]
  %s1 = inlined_call_operand.hbm [shape: f32[32,512], index: 1, kind: input, shape index: {}]
  %s2 = inlined_call_operand.vmem [shape: f32[1,512], index: 2, kind: input, shape index: {}]
  %s3 = inlined_call_operand.hbm [shape: f32[512,256], index: 3, kind: input, shape index: {}]
  %s4 = inlined_call_operand.vmem [shape: f32[1,256], index: 4, kind: input, shape index: {}]
  %s5 = inlined_call_operand.hbm [shape: f32[8,256], index: 5, kind: output, shape index: {}]
  %s6 = sld [smem:[#allocation0]]
  $region42: #{tpu_custom_call.1} parent=0
    _
  %s8 = ssub.s32 1, %s6
  %s9 = scalar_select 0, %s8, %s6
  $region1: #{tpu_custom_call.1} parent=0
    #allocation2 [shape = 'u8[4096]{0}', space=vmem, size = 0x1000, scoped, tag = 'input window, operand 0, single buffered']
    #allocation3 [shape = 's32[1]{0}', space=sflag, size = 0x4, scoped, tag = 'scoped memory for tpu_custom_call.1']
    #allocation4 [shape = 's32[1]{0}', space=sflag, size = 0x4, scoped, tag = 'scoped memory for tpu_custom_call.1']
    #allocation5 [shape = 'u8[65536]{0}', space=vmem, size = 0x10000, scoped, tag = 'input window, operand 1, single buffered']
    #allocation6 [shape = 's32[1]{0}', space=sflag, size = 0x4, scoped, tag = 'scoped memory for tpu_custom_call.1']
    #allocation7 [shape = 'u8[524288]{0}', space=vmem, size = 0x80000, scoped, tag = 'input window, operand 3, single buffered']
    #allocation8 [shape = 'u8[8192]{0}', space=vmem, size = 0x2000, scoped, tag = 'output window, operand 0, single buffered']
    %10 = vsyncpa [#allocation3], 0
    %11 = vsyncpa [#allocation6], 0
    %12 = vsyncpa [#allocation4], 0
    // Predicated region
    $region2: #{tpu_custom_call.1} parent=1 // pred_check
      _
    $region3: #{tpu_custom_call.1} parent=1 // pred_check_branch
      %14 = sbr.rel (0) target = $region5
    $region4: #{tpu_custom_call.1} parent=1 // pred_region
      %s16 = ssub.s32 128, 128
      %17 = vsyncadd [#allocation3], %s16
      %s19 = sshll.u32 [#allocation2], 4
      %s20 = int_to_ptr.vmem [resolvable:$true] %s19
      %22 = dma.hbm_to_vmem [thread:$0]  %s0, 128, %s20, [#allocation3]
    $region5: #{tpu_custom_call.1} parent=1 // pred_fallthru
      _
    // Predicated region
    $region6: #{tpu_custom_call.1} parent=1 // pred_check
      _
    $region7: #{tpu_custom_call.1} parent=1 // pred_check_branch
      %24 = sbr.rel (0) target = $region9
    $region8: #{tpu_custom_call.1} parent=1 // pred_region
      %s26 = ssub.s32 2048, 2048
      %27 = vsyncadd [#allocation6], %s26
      %s28 = sshll.u32 [#allocation5], 4
      %s29 = int_to_ptr.vmem [resolvable:$true] %s28
      %34 = dma.hbm_to_vmem [thread:$0]  %s1, 2048, %s29, [#allocation6], 512, 512, 32
    $region9: #{tpu_custom_call.1} parent=1 // pred_fallthru
      _
    // Predicated region
    $region10: #{tpu_custom_call.1} parent=1 // pred_check
      _
    $region11: #{tpu_custom_call.1} parent=1 // pred_check_branch
      %36 = sbr.rel (0) target = $region13
    $region12: #{tpu_custom_call.1} parent=1 // pred_region
      _
    $region13: #{tpu_custom_call.1} parent=1 // pred_fallthru
      _
    // Predicated region
    $region14: #{tpu_custom_call.1} parent=1 // pred_check
      _
    $region15: #{tpu_custom_call.1} parent=1 // pred_check_branch
      %38 = sbr.rel (0) target = $region17
    $region16: #{tpu_custom_call.1} parent=1 // pred_region
      %s40 = ssub.s32 16384, 16384
      %41 = vsyncadd [#allocation6], %s40
      %s42 = sshll.u32 [#allocation7], 4
      %s43 = int_to_ptr.vmem [resolvable:$true] %s42
      %48 = dma.hbm_to_vmem [thread:$0]  %s3, 16384, %s43, [#allocation6], 256, 256, 16
    $region17: #{tpu_custom_call.1} parent=1 // pred_fallthru
      _
    // Predicated region
    $region18: #{tpu_custom_call.1} parent=1 // pred_check
      _
    $region19: #{tpu_custom_call.1} parent=1 // pred_check_branch
      %50 = sbr.rel (0) target = $region21
    $region20: #{tpu_custom_call.1} parent=1 // pred_region
      _
    $region21: #{tpu_custom_call.1} parent=1 // pred_fallthru
      _
    // Predicated region
    $region22: #{tpu_custom_call.1} parent=1 // pred_check
      _
    $region23: #{tpu_custom_call.1} parent=1 // pred_check_branch
      %52 = sbr.rel (0) target = $region25
    $region24: #{tpu_custom_call.1} parent=1 // pred_region
      %53 = dma.done [#allocation3], 128
    $region25: #{tpu_custom_call.1} parent=1 // pred_fallthru
      _
    // Predicated region
    $region26: #{tpu_custom_call.1} parent=1 // pred_check
      _
    $region27: #{tpu_custom_call.1} parent=1 // pred_check_branch
      %55 = sbr.rel (0) target = $region29
    $region28: #{tpu_custom_call.1} parent=1 // pred_region
      %56 = dma.done [#allocation6], 2048
    $region29: #{tpu_custom_call.1} parent=1 // pred_fallthru
      _
    // Predicated region
    $region30: #{tpu_custom_call.1} parent=1 // pred_check
      _
    $region31: #{tpu_custom_call.1} parent=1 // pred_check_branch
      %58 = sbr.rel (0) target = $region33
    $region32: #{tpu_custom_call.1} parent=1 // pred_region
      %59 = dma.done [#allocation6], 16384
    $region33: #{tpu_custom_call.1} parent=1 // pred_fallthru
      _
    %v60 = vld [vmem:[#allocation2] sm:$0xff]
    %v61 = vld [vmem:[#allocation5] sm:$0xff]
    %v62 = vld [vmem:[#allocation5 + $0x8] sm:$0xff]
    %v63 = vld [vmem:[#allocation5 + $0x10] sm:$0xff]
    %v64 = vld [vmem:[#allocation5 + $0x18] sm:$0xff]
    %v65 = vld [vmem:[#allocation5 + $0x20] sm:$0xff]
    %v66 = vld [vmem:[#allocation5 + $0x28] sm:$0xff]
    %v67 = vld [vmem:[#allocation5 + $0x30] sm:$0xff]
    %v68 = vld [vmem:[#allocation5 + $0x38] sm:$0xff]
    %v69 = vld [vmem:[#allocation5 + $0x40] sm:$0xff]
    %v70 = vld [vmem:[#allocation5 + $0x48] sm:$0xff]
    %v71 = vld [vmem:[#allocation5 + $0x50] sm:$0xff]
    %v72 = vld [vmem:[#allocation5 + $0x58] sm:$0xff]
    %v73 = vld [vmem:[#allocation5 + $0x60] sm:$0xff]
    %v74 = vld [vmem:[#allocation5 + $0x68] sm:$0xff]
    %v75 = vld [vmem:[#allocation5 + $0x70] sm:$0xff]
    %v76 = vld [vmem:[#allocation5 + $0x78] sm:$0xff]
    %v77 = vld [vmem:[%s2] sm:$0xf]
    %v79 = vlaneseq
    %v80 = vshrl.u32 %v79, 7
    %v81 = vsub.s32 0, %v80
    %v82 = vrot.slane %v77, %v81
    %v83 = vlaneseq
    %v84 = vshrl.u32 %v83, 7
    %v85 = vsub.s32 1, %v84
    %v86 = vrot.slane %v77, %v85
    %v87 = vlaneseq
    %v88 = vshrl.u32 %v87, 7
    %v89 = vsub.s32 2, %v88
    %v90 = vrot.slane %v77, %v89
    %v91 = vlaneseq
    %v92 = vshrl.u32 %v91, 7
    %v93 = vsub.s32 3, %v92
    %v94 = vrot.slane %v77, %v93
    %vm99 = vcmask 261120
    %v101 = vsel %vm99, %v60, 0
    %103 = vmatprep.subr.mxu0 %v62
    %104 = vmatpush1.msra.mxu0 %v61
    %105 = vmatprep.subr.mxu0 %v66
    %106 = vmatpush1.msra.mxu0 %v65
    %107 = vmatprep.subr.mxu0 %v70
    %108 = vmatpush1.msra.mxu0 %v69
    %109 = vmatprep.subr.mxu0 %v74
    %110 = vmatpush1.msra.mxu0 %v73
    %111 = vmatprep.subr.mxu0 0.0
    %112 = vmatpush1.msra.mxu0 0.0
    %113 = vmatprep.subr.mxu0 0.0
    %114 = vmatpush1.msra.mxu0 0.0
    %115 = vmatprep.subr.mxu0 0.0
    %116 = vmatpush1.msra.mxu0 0.0
    %117 = vmatprep.subr.mxu0 0.0
    %118 = vmatpush1.msra.mxu0 0.0
    %119 = vmatprep.subr.mxu0 0.0
    %120 = vmatpush1.msra.mxu0 0.0
    %121 = vmatprep.subr.mxu0 0.0
    %122 = vmatpush1.msra.mxu0 0.0
    %123 = vmatprep.subr.mxu0 0.0
    %124 = vmatpush1.msra.mxu0 0.0
    %125 = vmatprep.subr.mxu0 0.0
    %126 = vmatpush1.msra.mxu0 0.0
    %127 = vmatprep.subr.mxu0 0.0
    %128 = vmatpush1.msra.mxu0 0.0
    %129 = vmatprep.subr.mxu0 0.0
    %130 = vmatpush1.msra.mxu0 0.0
    %131 = vmatprep.subr.mxu0 0.0
    %132 = vmatpush1.msra.mxu0 0.0
    %133 = vmatprep.subr.mxu0 0.0
    %134 = vmatpush1.msra.mxu0 0.0
    %135 = vmatprep.subr.mxu0 0.0
    %136 = vmatpush1.msra.mxu0 0.0
    %137 = vmatprep.subr.mxu0 0.0
    %138 = vmatpush1.msra.mxu0 0.0
    %139 = vmatprep.subr.mxu0 0.0
    %140 = vmatpush1.msra.mxu0 0.0
    %141 = vmatprep.subr.mxu0 0.0
    %142 = vmatpush1.msra.mxu0 0.0
    %143 = vmatprep.subr.mxu0 0.0
    %144 = vmatpush1.msra.mxu0 0.0
    %145 = vmatprep.subr.mxu0 0.0
    %146 = vmatpush1.msra.mxu0 0.0
    %147 = vmatprep.subr.mxu0 0.0
    %148 = vmatpush1.msra.mxu0 0.0
    %149 = vmatprep.subr.mxu0 0.0
    %150 = vmatpush1.msra.mxu0 0.0
    %151 = vmatprep.subr.mxu0 0.0
    %152 = vmatpush1.msra.mxu0 0.0
    %153 = vmatprep.subr.mxu0 0.0
    %154 = vmatpush1.msra.mxu0 0.0
    %155 = vmatprep.subr.mxu0 0.0
    %156 = vmatpush1.msra.mxu0 0.0
    %157 = vmatprep.subr.mxu0 0.0
    %158 = vmatpush1.msra.mxu0 0.0
    %159 = vmatprep.subr.mxu0 0.0
    %160 = vmatpush1.msra.mxu0 0.0
    %161 = vmatprep.subr.mxu0 0.0
    %162 = vmatpush1.msra.mxu0 0.0
    %163 = vmatprep.subr.mxu0 0.0
    %164 = vmatpush1.msra.mxu0 0.0
    %165 = vmatprep.subr.mxu0 0.0
    %166 = vmatpush1.msra.mxu0 0.0
    %167 = vmatprep.mubr.f32.mxu0 0.0
    %168 = vmatmul.mubr.f32.gmra.mrb[0].mxu0 %v101
    %v169 = vpop.f32.mrb[0].mxu0
    %v170 = vadd.f32 %v82, %v169
    %v171 = vpop.f32.mrb[0].mxu0
    %v172 = vadd.f32 %v86, %v171
    %173 = vdwg.mxu0
    %174 = vmatprep.subr.mxu0 %v64
    %175 = vmatpush1.msra.mxu0 %v63
    %176 = vmatprep.subr.mxu0 %v68
    %177 = vmatpush1.msra.mxu0 %v67
    %178 = vmatprep.subr.mxu0 %v72
    %179 = vmatpush1.msra.mxu0 %v71
    %180 = vmatprep.subr.mxu0 %v76
    %181 = vmatpush1.msra.mxu0 %v75
    %182 = vmatprep.subr.mxu0 0.0
    %183 = vmatpush1.msra.mxu0 0.0
    %184 = vmatprep.subr.mxu0 0.0
    %185 = vmatpush1.msra.mxu0 0.0
    %186 = vmatprep.subr.mxu0 0.0
    %187 = vmatpush1.msra.mxu0 0.0
    %188 = vmatprep.subr.mxu0 0.0
    %189 = vmatpush1.msra.mxu0 0.0
    %190 = vmatprep.subr.mxu0 0.0
    %191 = vmatpush1.msra.mxu0 0.0
    %192 = vmatprep.subr.mxu0 0.0
    %193 = vmatpush1.msra.mxu0 0.0
    %194 = vmatprep.subr.mxu0 0.0
    %195 = vmatpush1.msra.mxu0 0.0
    %196 = vmatprep.subr.mxu0 0.0
    %197 = vmatpush1.msra.mxu0 0.0
    %198 = vmatprep.subr.mxu0 0.0
    %199 = vmatpush1.msra.mxu0 0.0
    %200 = vmatprep.subr.mxu0 0.0
    %201 = vmatpush1.msra.mxu0 0.0
    %202 = vmatprep.subr.mxu0 0.0
    %203 = vmatpush1.msra.mxu0 0.0
    %204 = vmatprep.subr.mxu0 0.0
    %205 = vmatpush1.msra.mxu0 0.0
    %206 = vmatprep.subr.mxu0 0.0
    %207 = vmatpush1.msra.mxu0 0.0
    %208 = vmatprep.subr.mxu0 0.0
    %209 = vmatpush1.msra.mxu0 0.0
    %210 = vmatprep.subr.mxu0 0.0
    %211 = vmatpush1.msra.mxu0 0.0
    %212 = vmatprep.subr.mxu0 0.0
    %213 = vmatpush1.msra.mxu0 0.0
    %214 = vmatprep.subr.mxu0 0.0
    %215 = vmatpush1.msra.mxu0 0.0
    %216 = vmatprep.subr.mxu0 0.0
    %217 = vmatpush1.msra.mxu0 0.0
    %218 = vmatprep.subr.mxu0 0.0
    %219 = vmatpush1.msra.mxu0 0.0
    %220 = vmatprep.subr.mxu0 0.0
    %221 = vmatpush1.msra.mxu0 0.0
    %222 = vmatprep.subr.mxu0 0.0
    %223 = vmatpush1.msra.mxu0 0.0
    %224 = vmatprep.subr.mxu0 0.0
    %225 = vmatpush1.msra.mxu0 0.0
    %226 = vmatprep.subr.mxu0 0.0
    %227 = vmatpush1.msra.mxu0 0.0
    %228 = vmatprep.subr.mxu0 0.0
    %229 = vmatpush1.msra.mxu0 0.0
    %230 = vmatprep.subr.mxu0 0.0
    %231 = vmatpush1.msra.mxu0 0.0
    %232 = vmatprep.subr.mxu0 0.0
    %233 = vmatpush1.msra.mxu0 0.0
    %234 = vmatprep.subr.mxu0 0.0
    %235 = vmatpush1.msra.mxu0 0.0
    %236 = vmatprep.subr.mxu0 0.0
    %237 = vmatpush1.msra.mxu0 0.0
    %238 = vmatprep.mubr.f32.mxu0 0.0
    %239 = vmatmul.mubr.f32.gmra.mrb[0].mxu0 %v101
    %v240 = vpop.f32.mrb[0].mxu0
    %v241 = vadd.f32 %v90, %v240
    %v242 = vpop.f32.mrb[0].mxu0
    %v243 = vadd.f32 %v94, %v242
    %244 = vdwg.mxu0
    %v245 = vmax.f32 %v170, 0.0
    %v246 = vmax.f32 %v172, 0.0
    %v247 = vmax.f32 %v241, 0.0
    %v248 = vmax.f32 %v243, 0.0
    %v249 = vld [vmem:[#allocation7] sm:$0xff]
    %v250 = vld [vmem:[#allocation7 + $0x8] sm:$0xff]
    %v251 = vld [vmem:[#allocation7 + $0x10] sm:$0xff]
    %v252 = vld [vmem:[#allocation7 + $0x18] sm:$0xff]
    %v253 = vld [vmem:[#allocation7 + $0x20] sm:$0xff]
    %v254 = vld [vmem:[#allocation7 + $0x28] sm:$0xff]
    %v255 = vld [vmem:[#allocation7 + $0x30] sm:$0xff]
    %v256 = vld [vmem:[#allocation7 + $0x38] sm:$0xff]
    %v257 = vld [vmem:[#allocation7 + $0x40] sm:$0xff]
    %v258 = vld [vmem:[#allocation7 + $0x48] sm:$0xff]
    %v259 = vld [vmem:[#allocation7 + $0x50] sm:$0xff]
    %v260 = vld [vmem:[#allocation7 + $0x58] sm:$0xff]
    %v261 = vld [vmem:[#allocation7 + $0x60] sm:$0xff]
    %v262 = vld [vmem:[#allocation7 + $0x68] sm:$0xff]
    %v263 = vld [vmem:[#allocation7 + $0x70] sm:$0xff]
    %v264 = vld [vmem:[#allocation7 + $0x78] sm:$0xff]
    %v265 = vld [vmem:[#allocation7 + $0x80] sm:$0xff]
    %v266 = vld [vmem:[#allocation7 + $0x88] sm:$0xff]
    %v267 = vld [vmem:[#allocation7 + $0x90] sm:$0xff]
    %v268 = vld [vmem:[#allocation7 + $0x98] sm:$0xff]
    %v269 = vld [vmem:[#allocation7 + $0xa0] sm:$0xff]
    %v270 = vld [vmem:[#allocation7 + $0xa8] sm:$0xff]
    %v271 = vld [vmem:[#allocation7 + $0xb0] sm:$0xff]
    %v272 = vld [vmem:[#allocation7 + $0xb8] sm:$0xff]
    %v273 = vld [vmem:[#allocation7 + $0xc0] sm:$0xff]
    %v274 = vld [vmem:[#allocation7 + $0xc8] sm:$0xff]
    %v275 = vld [vmem:[#allocation7 + $0xd0] sm:$0xff]
    %v276 = vld [vmem:[#allocation7 + $0xd8] sm:$0xff]
    %v277 = vld [vmem:[#allocation7 + $0xe0] sm:$0xff]
    %v278 = vld [vmem:[#allocation7 + $0xe8] sm:$0xff]
    %v279 = vld [vmem:[#allocation7 + $0xf0] sm:$0xff]
    %v280 = vld [vmem:[#allocation7 + $0xf8] sm:$0xff]
    %v281 = vld [vmem:[#allocation7 + $0x100] sm:$0xff]
    %v282 = vld [vmem:[#allocation7 + $0x108] sm:$0xff]
    %v283 = vld [vmem:[#allocation7 + $0x110] sm:$0xff]
    %v284 = vld [vmem:[#allocation7 + $0x118] sm:$0xff]
    %v285 = vld [vmem:[#allocation7 + $0x120] sm:$0xff]
    %v286 = vld [vmem:[#allocation7 + $0x128] sm:$0xff]
    %v287 = vld [vmem:[#allocation7 + $0x130] sm:$0xff]
    %v288 = vld [vmem:[#allocation7 + $0x138] sm:$0xff]
    %v289 = vld [vmem:[#allocation7 + $0x140] sm:$0xff]
    %v290 = vld [vmem:[#allocation7 + $0x148] sm:$0xff]
    %v291 = vld [vmem:[#allocation7 + $0x150] sm:$0xff]
    %v292 = vld [vmem:[#allocation7 + $0x158] sm:$0xff]
    %v293 = vld [vmem:[#allocation7 + $0x160] sm:$0xff]
    %v294 = vld [vmem:[#allocation7 + $0x168] sm:$0xff]
    %v295 = vld [vmem:[#allocation7 + $0x170] sm:$0xff]
    %v296 = vld [vmem:[#allocation7 + $0x178] sm:$0xff]
    %v297 = vld [vmem:[#allocation7 + $0x180] sm:$0xff]
    %v298 = vld [vmem:[#allocation7 + $0x188] sm:$0xff]
    %v299 = vld [vmem:[#allocation7 + $0x190] sm:$0xff]
    %v300 = vld [vmem:[#allocation7 + $0x198] sm:$0xff]
    %v301 = vld [vmem:[#allocation7 + $0x1a0] sm:$0xff]
    %v302 = vld [vmem:[#allocation7 + $0x1a8] sm:$0xff]
    %v303 = vld [vmem:[#allocation7 + $0x1b0] sm:$0xff]
    %v304 = vld [vmem:[#allocation7 + $0x1b8] sm:$0xff]
    %v305 = vld [vmem:[#allocation7 + $0x1c0] sm:$0xff]
    %v306 = vld [vmem:[#allocation7 + $0x1c8] sm:$0xff]
    %v307 = vld [vmem:[#allocation7 + $0x1d0] sm:$0xff]
    %v308 = vld [vmem:[#allocation7 + $0x1d8] sm:$0xff]
    %v309 = vld [vmem:[#allocation7 + $0x1e0] sm:$0xff]
    %v310 = vld [vmem:[#allocation7 + $0x1e8] sm:$0xff]
    %v311 = vld [vmem:[#allocation7 + $0x1f0] sm:$0xff]
    %v312 = vld [vmem:[#allocation7 + $0x1f8] sm:$0xff]
    %v313 = vld [vmem:[#allocation7 + $0x200] sm:$0xff]
    %v314 = vld [vmem:[#allocation7 + $0x208] sm:$0xff]
    %v315 = vld [vmem:[#allocation7 + $0x210] sm:$0xff]
    %v316 = vld [vmem:[#allocation7 + $0x218] sm:$0xff]
    %v317 = vld [vmem:[#allocation7 + $0x220] sm:$0xff]
    %v318 = vld [vmem:[#allocation7 + $0x228] sm:$0xff]
    %v319 = vld [vmem:[#allocation7 + $0x230] sm:$0xff]
    %v320 = vld [vmem:[#allocation7 + $0x238] sm:$0xff]
    %v321 = vld [vmem:[#allocation7 + $0x240] sm:$0xff]
    %v322 = vld [vmem:[#allocation7 + $0x248] sm:$0xff]
    %v323 = vld [vmem:[#allocation7 + $0x250] sm:$0xff]
    %v324 = vld [vmem:[#allocation7 + $0x258] sm:$0xff]
    %v325 = vld [vmem:[#allocation7 + $0x260] sm:$0xff]
    %v326 = vld [vmem:[#allocation7 + $0x268] sm:$0xff]
    %v327 = vld [vmem:[#allocation7 + $0x270] sm:$0xff]
    %v328 = vld [vmem:[#allocation7 + $0x278] sm:$0xff]
    %v329 = vld [vmem:[#allocation7 + $0x280] sm:$0xff]
    %v330 = vld [vmem:[#allocation7 + $0x288] sm:$0xff]
    %v331 = vld [vmem:[#allocation7 + $0x290] sm:$0xff]
    %v332 = vld [vmem:[#allocation7 + $0x298] sm:$0xff]
    %v333 = vld [vmem:[#allocation7 + $0x2a0] sm:$0xff]
    %v334 = vld [vmem:[#allocation7 + $0x2a8] sm:$0xff]
    %v335 = vld [vmem:[#allocation7 + $0x2b0] sm:$0xff]
    %v336 = vld [vmem:[#allocation7 + $0x2b8] sm:$0xff]
    %v337 = vld [vmem:[#allocation7 + $0x2c0] sm:$0xff]
    %v338 = vld [vmem:[#allocation7 + $0x2c8] sm:$0xff]
    %v339 = vld [vmem:[#allocation7 + $0x2d0] sm:$0xff]
    %v340 = vld [vmem:[#allocation7 + $0x2d8] sm:$0xff]
    %v341 = vld [vmem:[#allocation7 + $0x2e0] sm:$0xff]
    %v342 = vld [vmem:[#allocation7 + $0x2e8] sm:$0xff]
    %v343 = vld [vmem:[#allocation7 + $0x2f0] sm:$0xff]
    %v344 = vld [vmem:[#allocation7 + $0x2f8] sm:$0xff]
    %v345 = vld [vmem:[#allocation7 + $0x300] sm:$0xff]
    %v346 = vld [vmem:[#allocation7 + $0x308] sm:$0xff]
    %v347 = vld [vmem:[#allocation7 + $0x310] sm:$0xff]
    %v348 = vld [vmem:[#allocation7 + $0x318] sm:$0xff]
    %v349 = vld [vmem:[#allocation7 + $0x320] sm:$0xff]
    %v350 = vld [vmem:[#allocation7 + $0x328] sm:$0xff]
    %v351 = vld [vmem:[#allocation7 + $0x330] sm:$0xff]
    %v352 = vld [vmem:[#allocation7 + $0x338] sm:$0xff]
    %v353 = vld [vmem:[#allocation7 + $0x340] sm:$0xff]
    %v354 = vld [vmem:[#allocation7 + $0x348] sm:$0xff]
    %v355 = vld [vmem:[#allocation7 + $0x350] sm:$0xff]
    %v356 = vld [vmem:[#allocation7 + $0x358] sm:$0xff]
    %v357 = vld [vmem:[#allocation7 + $0x360] sm:$0xff]
    %v358 = vld [vmem:[#allocation7 + $0x368] sm:$0xff]
    %v359 = vld [vmem:[#allocation7 + $0x370] sm:$0xff]
    %v360 = vld [vmem:[#allocation7 + $0x378] sm:$0xff]
    %v361 = vld [vmem:[#allocation7 + $0x380] sm:$0xff]
    %v362 = vld [vmem:[#allocation7 + $0x388] sm:$0xff]
    %v363 = vld [vmem:[#allocation7 + $0x390] sm:$0xff]
    %v364 = vld [vmem:[#allocation7 + $0x398] sm:$0xff]
    %v365 = vld [vmem:[#allocation7 + $0x3a0] sm:$0xff]
    %v366 = vld [vmem:[#allocation7 + $0x3a8] sm:$0xff]
    %v367 = vld [vmem:[#allocation7 + $0x3b0] sm:$0xff]
    %v368 = vld [vmem:[#allocation7 + $0x3b8] sm:$0xff]
    %v369 = vld [vmem:[#allocation7 + $0x3c0] sm:$0xff]
    %v370 = vld [vmem:[#allocation7 + $0x3c8] sm:$0xff]
    %v371 = vld [vmem:[#allocation7 + $0x3d0] sm:$0xff]
    %v372 = vld [vmem:[#allocation7 + $0x3d8] sm:$0xff]
    %v373 = vld [vmem:[#allocation7 + $0x3e0] sm:$0xff]
    %v374 = vld [vmem:[#allocation7 + $0x3e8] sm:$0xff]
    %v375 = vld [vmem:[#allocation7 + $0x3f0] sm:$0xff]
    %v376 = vld [vmem:[#allocation7 + $0x3f8] sm:$0xff]
    %v377 = vld [vmem:[%s4] sm:$0x3]
    %v379 = vlaneseq
    %v380 = vshrl.u32 %v379, 7
    %v381 = vsub.s32 0, %v380
    %v382 = vrot.slane %v377, %v381
    %v383 = vlaneseq
    %v384 = vshrl.u32 %v383, 7
    %v385 = vsub.s32 1, %v384
    %v386 = vrot.slane %v377, %v385
    %389 = vmatprep.subr.mxu0 %v250
    %390 = vmatpush1.msra.mxu0 %v249
    %391 = vmatprep.subr.mxu0 %v252
    %392 = vmatpush1.msra.mxu0 %v251
    %393 = vmatprep.subr.mxu0 %v254
    %394 = vmatpush1.msra.mxu0 %v253
    %395 = vmatprep.subr.mxu0 %v256
    %396 = vmatpush1.msra.mxu0 %v255
    %397 = vmatprep.subr.mxu0 %v258
    %398 = vmatpush1.msra.mxu0 %v257
    %399 = vmatprep.subr.mxu0 %v260
    %400 = vmatpush1.msra.mxu0 %v259
    %401 = vmatprep.subr.mxu0 %v262
    %402 = vmatpush1.msra.mxu0 %v261
    %403 = vmatprep.subr.mxu0 %v264
    %404 = vmatpush1.msra.mxu0 %v263
    %405 = vmatprep.subr.mxu0 %v266
    %406 = vmatpush1.msra.mxu0 %v265
    %407 = vmatprep.subr.mxu0 %v268
    %408 = vmatpush1.msra.mxu0 %v267
    %409 = vmatprep.subr.mxu0 %v270
    %410 = vmatpush1.msra.mxu0 %v269
    %411 = vmatprep.subr.mxu0 %v272
    %412 = vmatpush1.msra.mxu0 %v271
    %413 = vmatprep.subr.mxu0 %v274
    %414 = vmatpush1.msra.mxu0 %v273
    %415 = vmatprep.subr.mxu0 %v276
    %416 = vmatpush1.msra.mxu0 %v275
    %417 = vmatprep.subr.mxu0 %v278
    %418 = vmatpush1.msra.mxu0 %v277
    %419 = vmatprep.subr.mxu0 %v280
    %420 = vmatpush1.msra.mxu0 %v279
    %421 = vmatprep.subr.mxu0 %v282
    %422 = vmatpush1.msra.mxu0 %v281
    %423 = vmatprep.subr.mxu0 %v284
    %424 = vmatpush1.msra.mxu0 %v283
    %425 = vmatprep.subr.mxu0 %v286
    %426 = vmatpush1.msra.mxu0 %v285
    %427 = vmatprep.subr.mxu0 %v288
    %428 = vmatpush1.msra.mxu0 %v287
    %429 = vmatprep.subr.mxu0 %v290
    %430 = vmatpush1.msra.mxu0 %v289
    %431 = vmatprep.subr.mxu0 %v292
    %432 = vmatpush1.msra.mxu0 %v291
    %433 = vmatprep.subr.mxu0 %v294
    %434 = vmatpush1.msra.mxu0 %v293
    %435 = vmatprep.subr.mxu0 %v296
    %436 = vmatpush1.msra.mxu0 %v295
    %437 = vmatprep.subr.mxu0 %v298
    %438 = vmatpush1.msra.mxu0 %v297
    %439 = vmatprep.subr.mxu0 %v300
    %440 = vmatpush1.msra.mxu0 %v299
    %441 = vmatprep.subr.mxu0 %v302
    %442 = vmatpush1.msra.mxu0 %v301
    %443 = vmatprep.subr.mxu0 %v304
    %444 = vmatpush1.msra.mxu0 %v303
    %445 = vmatprep.subr.mxu0 %v306
    %446 = vmatpush1.msra.mxu0 %v305
    %447 = vmatprep.subr.mxu0 %v308
    %448 = vmatpush1.msra.mxu0 %v307
    %449 = vmatprep.subr.mxu0 %v310
    %450 = vmatpush1.msra.mxu0 %v309
    %451 = vmatprep.subr.mxu0 %v312
    %452 = vmatpush1.msra.mxu0 %v311
    %453 = vmatprep.mubr.f32.mxu0 %v246
    %454 = vmatmul.mubr.f32.gmra.mrb[0].mxu0 %v245
    %v455 = vpop.f32.mrb[0].mxu0
    %v456 = vadd.f32 %v382, %v455
    %v457 = vpop.f32.mrb[0].mxu0
    %v458 = vadd.f32 %v386, %v457
    %459 = vdwg.mxu0
    %460 = vmatprep.subr.mxu0 %v314
    %461 = vmatpush1.msra.mxu0 %v313
    %462 = vmatprep.subr.mxu0 %v316
    %463 = vmatpush1.msra.mxu0 %v315
    %464 = vmatprep.subr.mxu0 %v318
    %465 = vmatpush1.msra.mxu0 %v317
    %466 = vmatprep.subr.mxu0 %v320
    %467 = vmatpush1.msra.mxu0 %v319
    %468 = vmatprep.subr.mxu0 %v322
    %469 = vmatpush1.msra.mxu0 %v321
    %470 = vmatprep.subr.mxu0 %v324
    %471 = vmatpush1.msra.mxu0 %v323
    %472 = vmatprep.subr.mxu0 %v326
    %473 = vmatpush1.msra.mxu0 %v325
    %474 = vmatprep.subr.mxu0 %v328
    %475 = vmatpush1.msra.mxu0 %v327
    %476 = vmatprep.subr.mxu0 %v330
    %477 = vmatpush1.msra.mxu0 %v329
    %478 = vmatprep.subr.mxu0 %v332
    %479 = vmatpush1.msra.mxu0 %v331
    %480 = vmatprep.subr.mxu0 %v334
    %481 = vmatpush1.msra.mxu0 %v333
    %482 = vmatprep.subr.mxu0 %v336
    %483 = vmatpush1.msra.mxu0 %v335
    %484 = vmatprep.subr.mxu0 %v338
    %485 = vmatpush1.msra.mxu0 %v337
    %486 = vmatprep.subr.mxu0 %v340
    %487 = vmatpush1.msra.mxu0 %v339
    %488 = vmatprep.subr.mxu0 %v342
    %489 = vmatpush1.msra.mxu0 %v341
    %490 = vmatprep.subr.mxu0 %v344
    %491 = vmatpush1.msra.mxu0 %v343
    %492 = vmatprep.subr.mxu0 %v346
    %493 = vmatpush1.msra.mxu0 %v345
    %494 = vmatprep.subr.mxu0 %v348
    %495 = vmatpush1.msra.mxu0 %v347
    %496 = vmatprep.subr.mxu0 %v350
    %497 = vmatpush1.msra.mxu0 %v349
    %498 = vmatprep.subr.mxu0 %v352
    %499 = vmatpush1.msra.mxu0 %v351
    %500 = vmatprep.subr.mxu0 %v354
    %501 = vmatpush1.msra.mxu0 %v353
    %502 = vmatprep.subr.mxu0 %v356
    %503 = vmatpush1.msra.mxu0 %v355
    %504 = vmatprep.subr.mxu0 %v358
    %505 = vmatpush1.msra.mxu0 %v357
    %506 = vmatprep.subr.mxu0 %v360
    %507 = vmatpush1.msra.mxu0 %v359
    %508 = vmatprep.subr.mxu0 %v362
    %509 = vmatpush1.msra.mxu0 %v361
    %510 = vmatprep.subr.mxu0 %v364
    %511 = vmatpush1.msra.mxu0 %v363
    %512 = vmatprep.subr.mxu0 %v366
    %513 = vmatpush1.msra.mxu0 %v365
    %514 = vmatprep.subr.mxu0 %v368
    %515 = vmatpush1.msra.mxu0 %v367
    %516 = vmatprep.subr.mxu0 %v370
    %517 = vmatpush1.msra.mxu0 %v369
    %518 = vmatprep.subr.mxu0 %v372
    %519 = vmatpush1.msra.mxu0 %v371
    %520 = vmatprep.subr.mxu0 %v374
    %521 = vmatpush1.msra.mxu0 %v373
    %522 = vmatprep.subr.mxu0 %v376
    %523 = vmatpush1.msra.mxu0 %v375
    %524 = vmatprep.mubr.f32.mxu0 %v248
    %525 = vmatmul.mubr.f32.gmra.mrb[0].mxu0 %v247
    %v526 = vpop.f32.mrb[0].mxu0
    %v527 = vadd.f32 %v456, %v526
    %v528 = vpop.f32.mrb[0].mxu0
    %v529 = vadd.f32 %v458, %v528
    %530 = vdwg.mxu0
    %v531 = vsub.f32 0.0, %v527
    %v532 = vsub.f32 0.0, %v529
    %v533 = vmul.f32 %v531, 1.442695
    %v534 = vpow.pop %v533
    %v535 = vmul.f32 %v532, 1.442695
    %v536 = vpow.pop %v535
    %v537 = vadd.f32 %v534, 1.0
    %v538 = vadd.f32 %v536, 1.0
    %v539 = vrcp.pop %v537
    %v540 = vrcp.pop %v538
    %541 = vst [vmem:[#allocation8] sm:$0xff] %v539
    %542 = vst [vmem:[#allocation8 + $0x8] sm:$0xff] %v540
    // Predicated region
    $region34: #{tpu_custom_call.1} parent=1 // pred_check
      _
    $region35: #{tpu_custom_call.1} parent=1 // pred_check_branch
      %544 = sbr.rel (0) target = $region37
    $region36: #{tpu_custom_call.1} parent=1 // pred_region
      %s546 = ssub.s32 256, 256
      %547 = vsyncadd [#allocation4], %s546
      %s549 = sshll.u32 [#allocation8], 4
      %s550 = int_to_ptr.vmem [resolvable:$true] %s549
      %552 = dma.vmem_to_hbm [thread:$0]  %s550, 256, %s5, [#allocation4]
    $region37: #{tpu_custom_call.1} parent=1 // pred_fallthru
      _
    // Predicated region
    $region38: #{tpu_custom_call.1} parent=1 // pred_check
      _
    $region39: #{tpu_custom_call.1} parent=1 // pred_check_branch
      %554 = sbr.rel (0) target = $region41
    $region40: #{tpu_custom_call.1} parent=1 // pred_region
      %555 = dma.done [#allocation4], 256
    $region41: #{tpu_custom_call.1} parent=1 // pred_fallthru
      _
    %556 = vsyncpa [#allocation3], 1
    %557 = vsyncpa [#allocation6], 1
    %558 = vsyncpa [#allocation4], 1

</llo_original>
